<compile_context>
chip_gen: v5e
topology: v5e:2x2
jax: 0.10.0
libtpu: 0.0.40
codegen_flags: <defaults>
</compile_context>

<pallas_src>
import jax
import jax.numpy as jnp
from jax import lax
from jax.experimental import pallas as pl
from jax.experimental.pallas import tpu as pltpu

IN_FEATURES = 54
HIDDEN = 6
OUT_FEATURES = 2


def _round_up(n, m):
    return ((n + m - 1) // m) * m


def _mlp_kernel(x_ref, w1_ref, b1_ref, w2_ref, b2_ref, o_ref):
    # x_ref:  (TB, 54)  batch-major input tile (layout as supplied by caller)
    # w1_ref: (6, 54)   fc1 weight, PyTorch [out, in] layout
    # b1_ref: (6, 1)
    # w2_ref: (2, 6)    fc2 weight, PyTorch [out, in] layout
    # b2_ref: (2, 1)
    # o_ref:  (2, TB)   lane-dense output tile (batch on the lane axis)
    x = x_ref[...]

    # fc1: h[m, n] = sum_k W1[m, k] * x[n, k]  -> (HIDDEN, TB).
    # Contracting both operands on their last dim gives the transposed result
    # directly from the MXU (no in-kernel XLU transpose), so the sigmoid,
    # bias adds and the output store all operate on lane-dense vregs.
    h = lax.dot_general(
        w1_ref[...], x,
        dimension_numbers=(((1,), (1,)), ((), ())),
        preferred_element_type=jnp.float32)
    h = jax.nn.sigmoid(h + b1_ref[...])                      # (HIDDEN, TB)

    # fc2: plain (2,6)@(6,TB) matmul -> (OUT_FEATURES, TB), then bias.
    y = jnp.dot(w2_ref[...], h, preferred_element_type=jnp.float32)
    o_ref[...] = (y + b2_ref[...]).astype(o_ref.dtype)


def net_forward(x, w1, b1, w2, b2, *, tb=8192):
    """x: [B, 54] f32; w1: [6, 54]; b1: [6]; w2: [2, 6]; b2: [2] -> [B, 2]."""
    B = x.shape[0]
    # Batch tile: multiple of 128 (lane rule for the (2, TB) output block and
    # sublane rule for the (TB, 54) input block).  For B <= tb use a single
    # block equal to the full array extent (always legal, any B).
    tb = max(128, _round_up(tb, 128))
    TB = B if B <= tb else tb

    grid = (pl.cdiv(B, TB),)

    cost = pl.CostEstimate(
        flops=2 * B * (IN_FEATURES * HIDDEN + HIDDEN * OUT_FEATURES),
        transcendentals=B * HIDDEN,
        bytes_accessed=B * (IN_FEATURES + OUT_FEATURES) * 4,
    )

    out_t = pl.pallas_call(
        _mlp_kernel,
        out_shape=jax.ShapeDtypeStruct((OUT_FEATURES, B), jnp.float32),
        grid=grid,
        in_specs=[
            # x: streamed over the batch grid axis.
            pl.BlockSpec((TB, IN_FEATURES), lambda i: (i, 0)),
            # weights / biases: constant block index -> DMA'd once, VMEM-resident.
            pl.BlockSpec((HIDDEN, IN_FEATURES), lambda i: (0, 0)),
            pl.BlockSpec((HIDDEN, 1), lambda i: (0, 0)),
            pl.BlockSpec((OUT_FEATURES, HIDDEN), lambda i: (0, 0)),
            pl.BlockSpec((OUT_FEATURES, 1), lambda i: (0, 0)),
        ],
        # Lane-dense output slab: dense unmasked vst + contiguous writeback DMA.
        out_specs=pl.BlockSpec((OUT_FEATURES, TB), lambda i: (0, i)),
        compiler_params=pltpu.CompilerParams(
            dimension_semantics=("parallel",),   # megacore sharding on v7x
        ),
        cost_estimate=cost,
    )(x, w1, b1.reshape(HIDDEN, 1), w2, b2.reshape(OUT_FEATURES, 1))

    # Tiny [2, B] -> [B, 2] transpose outside the kernel (only 8*B bytes).
    return out_t.T


def init_params(key):
    """Deterministic init mimicking PyTorch nn.Linear default:
    U(-1/sqrt(fan_in), 1/sqrt(fan_in)); weights stored [out, in] like PyTorch."""
    k1, k2, k3, k4 = jax.random.split(key, 4)
    bound1 = 1.0 / jnp.sqrt(IN_FEATURES)
    bound2 = 1.0 / jnp.sqrt(HIDDEN)
    w1 = jax.random.uniform(k1, (HIDDEN, IN_FEATURES), jnp.float32,
                            minval=-bound1, maxval=bound1)
    b1 = jax.random.uniform(k2, (HIDDEN,), jnp.float32,
                            minval=-bound1, maxval=bound1)
    w2 = jax.random.uniform(k3, (OUT_FEATURES, HIDDEN), jnp.float32,
                            minval=-bound2, maxval=bound2)
    b2 = jax.random.uniform(k4, (OUT_FEATURES,), jnp.float32,
                            minval=-bound2, maxval=bound2)
    return w1, b1, w2, b2


def reference_forward(x, w1, b1, w2, b2):
    h = jax.nn.sigmoid(x @ w1.T + b1)
    return h @ w2.T + b2


if __name__ == "__main__":
    key = jax.random.PRNGKey(0)
    kx, kx2, kp = jax.random.split(key, 3)
    w1, b1, w2, b2 = init_params(kp)

    # --- small-batch check (single full-extent block) ---
    B = 16
    x = jax.random.normal(kx, (B, IN_FEATURES), jnp.float32)
    out = jax.block_until_ready(net_forward(x, w1, b1, w2, b2))
    ref = reference_forward(x, w1, b1, w2, b2)
    assert out.shape == (B, OUT_FEATURES)
    assert jnp.allclose(out, ref, atol=1e-5, rtol=1e-5), "mismatch vs reference (B=16)"

    # --- gridded check: multiple tiles + partial tail block (B % TB != 0) ---
    B2 = 4100  # with tb=1024 -> 5 blocks, last one partial (4 valid rows)
    x2 = jax.random.normal(kx2, (B2, IN_FEATURES), jnp.float32)
    out2 = jax.block_until_ready(net_forward(x2, w1, b1, w2, b2, tb=1024))
    ref2 = reference_forward(x2, w1, b1, w2, b2)
    assert out2.shape == (B2, OUT_FEATURES)
    assert jnp.allclose(out2, ref2, atol=1e-5, rtol=1e-5), "mismatch vs reference (B=4100)"

    print("KERNEL_OK")
</pallas_src>

<mosaic_0001>
module attributes {stable_mosaic.version = 11 : i64} {
  func.func @_mlp_kernel(%arg0: i32, %arg1: memref<16x54xf32, #tpu.memory_space<vmem>>, %arg2: memref<6x54xf32, #tpu.memory_space<vmem>>, %arg3: memref<6x1xf32, #tpu.memory_space<vmem>>, %arg4: memref<2x6xf32, #tpu.memory_space<vmem>>, %arg5: memref<2x1xf32, #tpu.memory_space<vmem>>, %arg6: memref<2x16xf32, #tpu.memory_space<vmem>>) attributes {dimension_semantics = [#tpu.dimension_semantics<parallel>], iteration_bounds = array<i64: 1>, scalar_prefetch = 0 : i64, scratch_operands = 0 : i64, tpu.core_type = #tpu.core_type<tc>, window_params = [{transform_indices = @transform_0, window_bounds = array<i64: 16, 54>}, {pipeline_mode = #tpu.pipeline_mode<synchronous>, transform_indices = @transform_1, window_bounds = array<i64: 6, 54>}, {pipeline_mode = #tpu.pipeline_mode<synchronous>, transform_indices = @transform_2, window_bounds = array<i64: 6, 1>}, {pipeline_mode = #tpu.pipeline_mode<synchronous>, transform_indices = @transform_3, window_bounds = array<i64: 2, 6>}, {pipeline_mode = #tpu.pipeline_mode<synchronous>, transform_indices = @transform_4, window_bounds = array<i64: 2, 1>}, {transform_indices = @transform_5, window_bounds = array<i64: 2, 16>}]} {
    %c0 = arith.constant 0 : index
    %c0_0 = arith.constant 0 : index
    %0 = vector.load %arg1[%c0, %c0_0] : memref<16x54xf32, #tpu.memory_space<vmem>>, vector<16x54xf32>
    %c0_1 = arith.constant 0 : index
    %c0_2 = arith.constant 0 : index
    %1 = vector.load %arg2[%c0_1, %c0_2] : memref<6x54xf32, #tpu.memory_space<vmem>>, vector<6x54xf32>
    %cst = arith.constant dense<0.000000e+00> : vector<6x16xf32>
    %2 = tpu.matmul %1, %0, %cst {dimension_numbers = #tpu.dot_dimension_numbers<[1], [1], [0], [0], [0, 0, 1, 0], [], []>} : vector<6x54xf32>, vector<16x54xf32>, vector<6x16xf32> -> vector<6x16xf32>
    %c0_3 = arith.constant 0 : index
    %c0_4 = arith.constant 0 : index
    %3 = vector.load %arg3[%c0_3, %c0_4] : memref<6x1xf32, #tpu.memory_space<vmem>>, vector<6x1xf32>
    %4 = vector.broadcast %3 : vector<6x1xf32> to vector<6x16xf32>
    %5 = arith.addf %2, %4 : vector<6x16xf32>
    %6 = arith.negf %5 : vector<6x16xf32>
    %7 = math.exp %6 : vector<6x16xf32>
    %cst_5 = arith.constant 1.000000e+00 : f32
    %8 = vector.broadcast %cst_5 : f32 to vector<6x16xf32>
    %9 = arith.addf %8, %7 : vector<6x16xf32>
    %10 = arith.divf %8, %9 : vector<6x16xf32>
    %c0_6 = arith.constant 0 : index
    %c0_7 = arith.constant 0 : index
    %11 = vector.load %arg4[%c0_6, %c0_7] : memref<2x6xf32, #tpu.memory_space<vmem>>, vector<2x6xf32>
    %cst_8 = arith.constant dense<0.000000e+00> : vector<2x16xf32>
    %12 = tpu.matmul %11, %10, %cst_8 {dimension_numbers = #tpu.dot_dimension_numbers<[1], [0], [0], [1], [0, 0, 1, 1], [], []>} : vector<2x6xf32>, vector<6x16xf32>, vector<2x16xf32> -> vector<2x16xf32>
    %c0_9 = arith.constant 0 : index
    %c0_10 = arith.constant 0 : index
    %13 = vector.load %arg5[%c0_9, %c0_10] : memref<2x1xf32, #tpu.memory_space<vmem>>, vector<2x1xf32>
    %14 = vector.broadcast %13 : vector<2x1xf32> to vector<2x16xf32>
    %15 = arith.addf %12, %14 : vector<2x16xf32>
    %c0_11 = arith.constant 0 : index
    %c0_12 = arith.constant 0 : index
    %16 = vector.load %arg6[%c0_11, %c0_12] : memref<2x16xf32, #tpu.memory_space<vmem>>, vector<2x16xf32>
    tpu.vector_store %arg6[%c0_11, %c0_12], %15 {strides = array<i32>} : memref<2x16xf32, #tpu.memory_space<vmem>>, vector<2x16xf32>,
    return
  }
  func.func @transform_0(%arg0: i32) -> (i32, i32) {
    %c0_i32 = arith.constant 0 : i32
    %c0_i32_0 = arith.constant 0 : i32
    return %arg0, %c0_i32 : i32, i32
  }
  func.func @transform_1(%arg0: i32) -> (i32, i32) {
    %c0_i32 = arith.constant 0 : i32
    %c0_i32_0 = arith.constant 0 : i32
    %c0_i32_1 = arith.constant 0 : i32
    return %c0_i32, %c0_i32_0 : i32, i32
  }
  func.func @transform_2(%arg0: i32) -> (i32, i32) {
    %c0_i32 = arith.constant 0 : i32
    %c0_i32_0 = arith.constant 0 : i32
    %c0_i32_1 = arith.constant 0 : i32
    return %c0_i32, %c0_i32_0 : i32, i32
  }
  func.func @transform_3(%arg0: i32) -> (i32, i32) {
    %c0_i32 = arith.constant 0 : i32
    %c0_i32_0 = arith.constant 0 : i32
    %c0_i32_1 = arith.constant 0 : i32
    return %c0_i32, %c0_i32_0 : i32, i32
  }
  func.func @transform_4(%arg0: i32) -> (i32, i32) {
    %c0_i32 = arith.constant 0 : i32
    %c0_i32_0 = arith.constant 0 : i32
    %c0_i32_1 = arith.constant 0 : i32
    return %c0_i32, %c0_i32_0 : i32, i32
  }
  func.func @transform_5(%arg0: i32) -> (i32, i32) {
    %c0_i32 = arith.constant 0 : i32
    %c0_i32_0 = arith.constant 0 : i32
    return %c0_i32, %arg0 : i32, i32
  }
}

</mosaic_0001>

<llo_original>
// kernel: tpu_custom_call.1
$region0: #{tpu_custom_call.1}
  #allocation0 [shape = 'u32[]', space=smem, size = 0x4, offset = 0x4, fixed_abs, tag = 'smem constant byte address 0x4 - core index']
  #allocation1 [shape = 'u32[72,128]{1,0:T(1,128)}', space=vmem, size = 0x9000, scoped, tag = 'internal scratch']
  %s0 = inlined_call_operand.hbm [shape: f32[16,54], index: 0, kind: input, shape index: {}]
  %s1 = inlined_call_operand.vmem [shape: f32[6,54], index: 1, kind: input, shape index: {}]
  %s2 = inlined_call_operand.vmem [shape: f32[6,1], index: 2, kind: input, shape index: {}]
  %s3 = inlined_call_operand.vmem [shape: f32[2,6], index: 3, kind: input, shape index: {}]
  %s4 = inlined_call_operand.vmem [shape: f32[2,1], index: 4, kind: input, shape index: {}]
  %s5 = inlined_call_operand.hbm [shape: f32[2,16], index: 5, kind: output, shape index: {}]
  %s6 = sld [smem:[#allocation0]]
  $region34: #{tpu_custom_call.1} parent=0
    _
  %s8 = ssub.s32 1, %s6
  %s9 = scalar_select 0, %s8, %s6
  $region1: #{tpu_custom_call.1} parent=0
    #allocation2 [shape = 'u8[8192]{0}', space=vmem, size = 0x2000, scoped, tag = 'input window, operand 0, single buffered']
    #allocation3 [shape = 's32[1]{0}', space=sflag, size = 0x4, scoped, tag = 'scoped memory for tpu_custom_call.1']
    #allocation4 [shape = 's32[1]{0}', space=sflag, size = 0x4, scoped, tag = 'scoped memory for tpu_custom_call.1']
    #allocation5 [shape = 'u8[1024]{0}', space=vmem, size = 0x400, scoped, tag = 'output window, operand 0, single buffered']
    %10 = vsyncpa [#allocation3], 0
    %11 = vsyncpa [#allocation4], 0
    // Predicated region
    $region2: #{tpu_custom_call.1} parent=1 // pred_check
      _
    $region3: #{tpu_custom_call.1} parent=1 // pred_check_branch
      %13 = sbr.rel (0) target = $region5
    $region4: #{tpu_custom_call.1} parent=1 // pred_region
      %15 = vsyncadd [#allocation3], 0
      %s16 = sshll.u32 %s0, 4
      %s17 = int_to_ptr.hbm [resolvable:$true] %s16
      %s18 = sshll.u32 [#allocation2], 4
      %s19 = int_to_ptr.vmem [resolvable:$true] %s18
      %24 = dma.hbm_to_vmem [thread:$0]  %s17, 256, %s19, [#allocation3], 128, 128, 8
    $region5: #{tpu_custom_call.1} parent=1 // pred_fallthru
      _
    // Predicated region
    $region6: #{tpu_custom_call.1} parent=1 // pred_check
      _
    $region7: #{tpu_custom_call.1} parent=1 // pred_check_branch
      %26 = sbr.rel (0) target = $region9
    $region8: #{tpu_custom_call.1} parent=1 // pred_region
      _
    $region9: #{tpu_custom_call.1} parent=1 // pred_fallthru
      _
    // Predicated region
    $region10: #{tpu_custom_call.1} parent=1 // pred_check
      _
    $region11: #{tpu_custom_call.1} parent=1 // pred_check_branch
      %28 = sbr.rel (0) target = $region13
    $region12: #{tpu_custom_call.1} parent=1 // pred_region
      _
    $region13: #{tpu_custom_call.1} parent=1 // pred_fallthru
      _
    // Predicated region
    $region14: #{tpu_custom_call.1} parent=1 // pred_check
      _
    $region15: #{tpu_custom_call.1} parent=1 // pred_check_branch
      %30 = sbr.rel (0) target = $region17
    $region16: #{tpu_custom_call.1} parent=1 // pred_region
      _
    $region17: #{tpu_custom_call.1} parent=1 // pred_fallthru
      _
    // Predicated region
    $region18: #{tpu_custom_call.1} parent=1 // pred_check
      _
    $region19: #{tpu_custom_call.1} parent=1 // pred_check_branch
      %32 = sbr.rel (0) target = $region21
    $region20: #{tpu_custom_call.1} parent=1 // pred_region
      _
    $region21: #{tpu_custom_call.1} parent=1 // pred_fallthru
      _
    // Predicated region
    $region22: #{tpu_custom_call.1} parent=1 // pred_check
      _
    $region23: #{tpu_custom_call.1} parent=1 // pred_check_branch
      %34 = sbr.rel (0) target = $region25
    $region24: #{tpu_custom_call.1} parent=1 // pred_region
      %36 = dma.done [#allocation3], 256
    $region25: #{tpu_custom_call.1} parent=1 // pred_fallthru
      _
    %v37 = vld [vmem:[#allocation2] sm:$0xff]
    %v38 = vld [vmem:[#allocation2 + $0x8] sm:$0xff]
    %v39 = vld [vmem:[%s1] sm:$0x3f]
    %v40 = vld [vmem:[%s2] sm:$0x3f]
    %42 = vset.pattern.permute.xlu0 0
    %43 = vperm.xlu0 %42, %v40
    %v44 = vpop.permute.xlu0 %43
    %vm46 = vcmask 441344
    %v48 = vsel %vm46, %v39, 0
    %v51 = vsel %vm46, %v37, 0
    %v54 = vsel %vm46, %v38, 0
    %56 = vmatpush.xpose.msra.mxu0 0.0
    %57 = vmatpush.xpose.msra.mxu0 0.0
    %58 = vmatpush.xpose.msra.mxu0 0.0
    %59 = vmatpush.xpose.msra.mxu0 0.0
    %60 = vmatpush.xpose.msra.mxu0 0.0
    %61 = vmatpush.xpose.msra.mxu0 0.0
    %62 = vmatpush.xpose.msra.mxu0 0.0
    %63 = vmatpush.xpose.msra.mxu0 0.0
    %64 = vmatpush.xpose.msra.mxu0 0.0
    %65 = vmatpush.xpose.msra.mxu0 0.0
    %66 = vmatpush.xpose.msra.mxu0 0.0
    %67 = vmatpush.xpose.msra.mxu0 0.0
    %68 = vmatpush.xpose.msra.mxu0 0.0
    %69 = vmatpush.xpose.msra.mxu0 0.0
    %70 = vmatpush.xpose.msra.mxu0 %v54
    %71 = vmatpush.xpose.msra.mxu0 %v51
    %72 = vmatmul.f32.gmra.mxu0 %v48
    %v73 = vpop.f32.mrf.mxu0
    %v74 = vadd.f32 %v44, %v73
    %75 = vdwg.mxu0
    %v76 = vxor.u32 %v74, 2147483648
    %v77 = vmul.f32 %v76, 1.442695
    %v78 = vpow.pop %v77
    %v79 = vadd.f32 %v78, 1.0
    %v80 = vrcp.pop %v79
    %v81 = vmul.f32 %v79, %v80
    %v82 = vsub.f32 1.0, %v81
    %v83 = vmul.f32 %v80, %v82
    %v84 = vadd.f32 %v80, %v83
    %vm85 = vweird.f32 %v79
    %vm86 = vweird.f32 %v80
    %vm87 = vmor %vm85, %vm86
    %v88 = vsel %vm87, %v80, %v84
    %v89 = vand.u32 2147483647, %v79
    %vm90 = vcmp.eq.f32.partialorder %v89, 8.507059e+37
    %v91 = vand.u32 %v79, 2147483648
    %v92 = vor.u32 1.1754944e-38, %v91
    %v93 = vsel %vm90, %v92, %v88
    %v94 = vmul.f32 1.0, %v93
    %v95 = vld [vmem:[%s3] sm:$0x3]
    %v96 = vld [vmem:[%s4] sm:$0x3]
    %98 = vset.pattern.permute.xlu0 0
    %99 = vperm.xlu0 %98, %v96
    %v100 = vpop.permute.xlu0 %99
    %vm102 = vcmask 48128
    %v104 = vsel %vm102, %v95, 0
    %vm106 = vcmask 1045504
    %v108 = vsel %vm106, %v94, 0
    %110 = vmatpush.msra.mxu0 0.0
    %111 = vmatpush.msra.mxu0 0.0
    %112 = vmatpush.msra.mxu0 0.0
    %113 = vmatpush.msra.mxu0 0.0
    %114 = vmatpush.msra.mxu0 0.0
    %115 = vmatpush.msra.mxu0 0.0
    %116 = vmatpush.msra.mxu0 0.0
    %117 = vmatpush.msra.mxu0 0.0
    %118 = vmatpush.msra.mxu0 0.0
    %119 = vmatpush.msra.mxu0 0.0
    %120 = vmatpush.msra.mxu0 0.0
    %121 = vmatpush.msra.mxu0 0.0
    %122 = vmatpush.msra.mxu0 0.0
    %123 = vmatpush.msra.mxu0 0.0
    %124 = vmatpush.msra.mxu0 0.0
    %125 = vmatpush.msra.mxu0 %v108
    %126 = vmatmul.f32.gmra.mxu0 %v104
    %v127 = vpop.f32.mrf.mxu0
    %v128 = vadd.f32 %v100, %v127
    %129 = vdwg.mxu0
    %vm130 = vcmask 123904
    %131 = vst.msk [vmem:[#allocation5] sm:$0x3] %vm130, %v128
    // Predicated region
    $region26: #{tpu_custom_call.1} parent=1 // pred_check
      _
    $region27: #{tpu_custom_call.1} parent=1 // pred_check_branch
      %133 = sbr.rel (0) target = $region29
    $region28: #{tpu_custom_call.1} parent=1 // pred_region
      %135 = vsyncadd [#allocation4], 0
      %s137 = sshll.u32 [#allocation5], 4
      %s138 = int_to_ptr.vmem [resolvable:$true] %s137
      %s139 = sshll.u32 %s5, 4
      %s140 = int_to_ptr.hbm [resolvable:$true] %s139
      %142 = dma.vmem_to_hbm [thread:$0]  %s138, 32, %s140, [#allocation4]
    $region29: #{tpu_custom_call.1} parent=1 // pred_fallthru
      _
    // Predicated region
    $region30: #{tpu_custom_call.1} parent=1 // pred_check
      _
    $region31: #{tpu_custom_call.1} parent=1 // pred_check_branch
      %144 = sbr.rel (0) target = $region33
    $region32: #{tpu_custom_call.1} parent=1 // pred_region
      %146 = dma.done [#allocation4], 32
    $region33: #{tpu_custom_call.1} parent=1 // pred_fallthru
      _
    %147 = vsyncpa [#allocation3], 1
    %148 = vsyncpa [#allocation4], 1

</llo_original>
